<compile_context>
chip_gen: v7x
topology: tpu7x:2x2x1
jax: 0.10.0
libtpu: 0.0.40
codegen_flags: <defaults>
</compile_context>

<pallas_src>
import jax
import jax.numpy as jnp
import numpy as np
from jax.experimental import pallas as pl
from jax.experimental.pallas import tpu as pltpu


def _dwconv_kernel(w_ref, b_ref, x_ref, o_ref, xp_ref):
    # w_ref : (3, 3) f32 in SMEM (shared conv kernel)
    # b_ref : (1,)  f32 in SMEM (shared bias)
    # x_ref : (TB, H, W) unpadded input planes in VMEM
    # o_ref : (TB, H, W) output planes in VMEM
    # xp_ref: (TB, H+2, W+2) f32 VMEM scratch used as a zero-halo'ed copy
    TB, H, W = o_ref.shape

    # Build the halo'ed plane in VMEM (padding is done here, not in HBM).
    # Only the 1-pixel border is zeroed; re-done every step so it stays correct
    # when the parallel grid axis is sharded across TensorCores (each core has
    # its own scratch instance).
    xp_ref[:, 0:1, :] = jnp.zeros((TB, 1, W + 2), jnp.float32)
    xp_ref[:, H + 1:H + 2, :] = jnp.zeros((TB, 1, W + 2), jnp.float32)
    xp_ref[:, :, 0:1] = jnp.zeros((TB, H + 2, 1), jnp.float32)
    xp_ref[:, :, W + 1:W + 2] = jnp.zeros((TB, H + 2, 1), jnp.float32)
    xp_ref[:, 1:H + 1, 1:W + 1] = x_ref[...].astype(jnp.float32)

    # Bias folded into the accumulator init (saves one full VALU pass).
    acc = jnp.full((TB, H, W), b_ref[0], jnp.float32)

    # 3x3 conv as 9 statically-shifted elementwise MACs (VPU work; an MXU
    # matmul would waste >90% of the systolic array on a depth-9 contraction).
    for kh in range(3):
        for kw in range(3):
            acc = acc + xp_ref[:, kh:kh + H, kw:kw + W] * w_ref[kh, kw]

    o_ref[...] = acc.astype(o_ref.dtype)


def _pick_block_planes(bc, H, W, budget_bytes=16 * 1024 * 1024):
    """Pick how many (H, W) planes to process per grid step.

    Per-plane f32 footprint: double-buffered input + double-buffered output
    + the halo scratch.  Budget is kept well under the 32 MiB scoped-VMEM
    default so it is safe on v5e/v6e/v7x without vmem_limit_bytes overrides.
    """
    per_plane = 4 * (4 * H * W + (H + 2) * (W + 2))
    tb = max(1, budget_bytes // per_plane)
    tb = min(tb, bc)
    if bc >= 2:
        # Keep at least two grid steps so both v7x TensorCores get work.
        tb = min(tb, pl.cdiv(bc, 2))
    # Prefer an exact divisor of bc (avoids a ragged final block) if one is
    # reasonably close; otherwise Pallas handles the partial edge block.
    for cand in range(tb, max(tb // 2, 1) - 1, -1):
        if bc % cand == 0:
            return cand
    return tb


def depthwise_clipseg_conv(x, weight, bias):
    """x: (B, C, H, W); weight: (3, 3); bias: (1,). Returns (B, C, H, W)."""
    B, C, H, W = x.shape
    bc = B * C
    x_flat = x.reshape(bc, H, W)

    tb = _pick_block_planes(bc, H, W)
    grid = (pl.cdiv(bc, tb),)

    # TODO(synk): for small W with many channels a channels-last (H, W, BC)
    # layout would give lane-dense stores; kept NCHW planes since real CLIPSeg
    # spatial dims (352) are already lane-wide and the test BC is tiny.
    out_flat = pl.pallas_call(
        _dwconv_kernel,
        out_shape=jax.ShapeDtypeStruct((bc, H, W), x.dtype),
        grid=grid,
        in_specs=[
            pl.BlockSpec(memory_space=pltpu.SMEM),               # weight (3, 3)
            pl.BlockSpec(memory_space=pltpu.SMEM),               # bias (1,)
            pl.BlockSpec((tb, H, W), lambda i: (i, 0, 0)),        # input planes
        ],
        out_specs=pl.BlockSpec((tb, H, W), lambda i: (i, 0, 0)),
        scratch_shapes=[pltpu.VMEM((tb, H + 2, W + 2), jnp.float32)],
        compiler_params=pltpu.CompilerParams(
            dimension_semantics=("parallel",)),
    )(weight, bias, x_flat)

    return out_flat.reshape(B, C, H, W)


def _reference(x, weight, bias):
    # Plain-JAX reference: apply the same 1->1 3x3 conv to each channel.
    B, C, H, W = x.shape
    xf = x.reshape(B * C, 1, H, W)
    wf = weight.reshape(1, 1, 3, 3)
    out = jax.lax.conv_general_dilated(
        xf.astype(jnp.float32), wf.astype(jnp.float32),
        window_strides=(1, 1), padding=((1, 1), (1, 1)),
        dimension_numbers=("NCHW", "OIHW", "NCHW"))
    out = out + bias[0]
    return out.reshape(B, C, H, W).astype(x.dtype)


if __name__ == "__main__":
    key = jax.random.PRNGKey(0)
    kx, kw, kb = jax.random.split(key, 3)

    B, C, H, W = 2, 4, 16, 16
    x = jax.random.normal(kx, (B, C, H, W), dtype=jnp.float32)

    # Deterministic parameter init (nn.Conv2d(1,1,3) default is uniform
    # in +/- 1/sqrt(fan_in), fan_in = 1*3*3 = 9).
    bound = 1.0 / np.sqrt(9.0)
    weight = jax.random.uniform(kw, (3, 3), jnp.float32, -bound, bound)
    bias = jax.random.uniform(kb, (1,), jnp.float32, -bound, bound)

    out = depthwise_clipseg_conv(x, weight, bias)
    out = jax.block_until_ready(out)

    ref = _reference(x, weight, bias)
    np.testing.assert_allclose(np.asarray(out), np.asarray(ref), rtol=1e-5, atol=1e-5)

    print("KERNEL_OK")
</pallas_src>

<mosaic_0001>
module attributes {stable_mosaic.version = 11 : i64} {
  func.func @_dwconv_kernel(%arg0: i32, %arg1: memref<3x3xf32, #tpu.memory_space<smem>>, %arg2: memref<1xf32, #tpu.memory_space<smem>>, %arg3: memref<4x16x16xf32, #tpu.memory_space<vmem>>, %arg4: memref<4x16x16xf32, #tpu.memory_space<vmem>>, %arg5: memref<4x18x18xf32, #tpu.memory_space<vmem>>) attributes {dimension_semantics = [#tpu.dimension_semantics<parallel>], iteration_bounds = array<i64: 2>, scalar_prefetch = 0 : i64, scratch_operands = 1 : i64, tpu.core_type = #tpu.core_type<tc>, window_params = [{transform_indices = @transform_0, window_bounds = array<i64: 3, 3>}, {transform_indices = @transform_1, window_bounds = array<i64: 1>}, {transform_indices = @transform_2, window_bounds = array<i64: 4, 16, 16>}, {transform_indices = @transform_3, window_bounds = array<i64: 4, 16, 16>}]} {
    %cst = arith.constant 0.000000e+00 : f32
    %0 = vector.broadcast %cst : f32 to vector<4x1x18xf32>
    %c0 = arith.constant 0 : index
    %c0_0 = arith.constant 0 : index
    %c0_1 = arith.constant 0 : index
    %1 = vector.load %arg5[%c0, %c0_0, %c0_1] : memref<4x18x18xf32, #tpu.memory_space<vmem>>, vector<4x1x18xf32>
    tpu.vector_store %arg5[%c0, %c0_0, %c0_1], %0 {strides = array<i32>} : memref<4x18x18xf32, #tpu.memory_space<vmem>>, vector<4x1x18xf32>,
    %cst_2 = arith.constant 0.000000e+00 : f32
    %2 = vector.broadcast %cst_2 : f32 to vector<4x1x18xf32>
    %c0_3 = arith.constant 0 : index
    %c17 = arith.constant 17 : index
    %c0_4 = arith.constant 0 : index
    %3 = vector.load %arg5[%c0_3, %c17, %c0_4] : memref<4x18x18xf32, #tpu.memory_space<vmem>>, vector<4x1x18xf32>
    tpu.vector_store %arg5[%c0_3, %c17, %c0_4], %2 {strides = array<i32>} : memref<4x18x18xf32, #tpu.memory_space<vmem>>, vector<4x1x18xf32>,
    %cst_5 = arith.constant 0.000000e+00 : f32
    %4 = vector.broadcast %cst_5 : f32 to vector<4x18x1xf32>
    %c0_6 = arith.constant 0 : index
    %c0_7 = arith.constant 0 : index
    %c0_8 = arith.constant 0 : index
    %5 = vector.load %arg5[%c0_6, %c0_7, %c0_8] : memref<4x18x18xf32, #tpu.memory_space<vmem>>, vector<4x18x1xf32>
    tpu.vector_store %arg5[%c0_6, %c0_7, %c0_8], %4 {strides = array<i32>} : memref<4x18x18xf32, #tpu.memory_space<vmem>>, vector<4x18x1xf32>,
    %cst_9 = arith.constant 0.000000e+00 : f32
    %6 = vector.broadcast %cst_9 : f32 to vector<4x18x1xf32>
    %c0_10 = arith.constant 0 : index
    %c0_11 = arith.constant 0 : index
    %c17_12 = arith.constant 17 : index
    %7 = vector.load %arg5[%c0_10, %c0_11, %c17_12] : memref<4x18x18xf32, #tpu.memory_space<vmem>>, vector<4x18x1xf32>
    tpu.vector_store %arg5[%c0_10, %c0_11, %c17_12], %6 {strides = array<i32>} : memref<4x18x18xf32, #tpu.memory_space<vmem>>, vector<4x18x1xf32>,
    %c0_13 = arith.constant 0 : index
    %c0_14 = arith.constant 0 : index
    %c0_15 = arith.constant 0 : index
    %8 = vector.load %arg3[%c0_13, %c0_14, %c0_15] : memref<4x16x16xf32, #tpu.memory_space<vmem>>, vector<4x16x16xf32>
    %c0_16 = arith.constant 0 : index
    %c1 = arith.constant 1 : index
    %c1_17 = arith.constant 1 : index
    %9 = vector.load %arg5[%c0_16, %c1, %c1_17] : memref<4x18x18xf32, #tpu.memory_space<vmem>>, vector<4x16x16xf32>
    tpu.vector_store %arg5[%c0_16, %c1, %c1_17], %8 {strides = array<i32>} : memref<4x18x18xf32, #tpu.memory_space<vmem>>, vector<4x16x16xf32>,
    %c0_18 = arith.constant 0 : index
    %10 = memref.load %arg2[%c0_18] : memref<1xf32, #tpu.memory_space<smem>>
    %11 = vector.broadcast %10 : f32 to vector<4x16x16xf32>
    %c0_19 = arith.constant 0 : index
    %c0_20 = arith.constant 0 : index
    %c0_21 = arith.constant 0 : index
    %12 = vector.load %arg5[%c0_19, %c0_20, %c0_21] : memref<4x18x18xf32, #tpu.memory_space<vmem>>, vector<4x16x16xf32>
    %c0_22 = arith.constant 0 : index
    %c0_23 = arith.constant 0 : index
    %13 = memref.load %arg1[%c0_22, %c0_23] : memref<3x3xf32, #tpu.memory_space<smem>>
    %14 = vector.broadcast %13 : f32 to vector<4x16x16xf32>
    %15 = arith.mulf %12, %14 : vector<4x16x16xf32>
    %16 = arith.addf %11, %15 : vector<4x16x16xf32>
    %c0_24 = arith.constant 0 : index
    %c0_25 = arith.constant 0 : index
    %c1_26 = arith.constant 1 : index
    %17 = vector.load %arg5[%c0_24, %c0_25, %c1_26] : memref<4x18x18xf32, #tpu.memory_space<vmem>>, vector<4x16x16xf32>
    %c0_27 = arith.constant 0 : index
    %c1_28 = arith.constant 1 : index
    %18 = memref.load %arg1[%c0_27, %c1_28] : memref<3x3xf32, #tpu.memory_space<smem>>
    %19 = vector.broadcast %18 : f32 to vector<4x16x16xf32>
    %20 = arith.mulf %17, %19 : vector<4x16x16xf32>
    %21 = arith.addf %16, %20 : vector<4x16x16xf32>
    %c0_29 = arith.constant 0 : index
    %c0_30 = arith.constant 0 : index
    %c2 = arith.constant 2 : index
    %22 = vector.load %arg5[%c0_29, %c0_30, %c2] : memref<4x18x18xf32, #tpu.memory_space<vmem>>, vector<4x16x16xf32>
    %c0_31 = arith.constant 0 : index
    %c2_32 = arith.constant 2 : index
    %23 = memref.load %arg1[%c0_31, %c2_32] : memref<3x3xf32, #tpu.memory_space<smem>>
    %24 = vector.broadcast %23 : f32 to vector<4x16x16xf32>
    %25 = arith.mulf %22, %24 : vector<4x16x16xf32>
    %26 = arith.addf %21, %25 : vector<4x16x16xf32>
    %c0_33 = arith.constant 0 : index
    %c1_34 = arith.constant 1 : index
    %c0_35 = arith.constant 0 : index
    %27 = vector.load %arg5[%c0_33, %c1_34, %c0_35] : memref<4x18x18xf32, #tpu.memory_space<vmem>>, vector<4x16x16xf32>
    %c1_36 = arith.constant 1 : index
    %c0_37 = arith.constant 0 : index
    %28 = memref.load %arg1[%c1_36, %c0_37] : memref<3x3xf32, #tpu.memory_space<smem>>
    %29 = vector.broadcast %28 : f32 to vector<4x16x16xf32>
    %30 = arith.mulf %27, %29 : vector<4x16x16xf32>
    %31 = arith.addf %26, %30 : vector<4x16x16xf32>
    %c0_38 = arith.constant 0 : index
    %c1_39 = arith.constant 1 : index
    %c1_40 = arith.constant 1 : index
    %32 = vector.load %arg5[%c0_38, %c1_39, %c1_40] : memref<4x18x18xf32, #tpu.memory_space<vmem>>, vector<4x16x16xf32>
    %c1_41 = arith.constant 1 : index
    %c1_42 = arith.constant 1 : index
    %33 = memref.load %arg1[%c1_41, %c1_42] : memref<3x3xf32, #tpu.memory_space<smem>>
    %34 = vector.broadcast %33 : f32 to vector<4x16x16xf32>
    %35 = arith.mulf %32, %34 : vector<4x16x16xf32>
    %36 = arith.addf %31, %35 : vector<4x16x16xf32>
    %c0_43 = arith.constant 0 : index
    %c1_44 = arith.constant 1 : index
    %c2_45 = arith.constant 2 : index
    %37 = vector.load %arg5[%c0_43, %c1_44, %c2_45] : memref<4x18x18xf32, #tpu.memory_space<vmem>>, vector<4x16x16xf32>
    %c1_46 = arith.constant 1 : index
    %c2_47 = arith.constant 2 : index
    %38 = memref.load %arg1[%c1_46, %c2_47] : memref<3x3xf32, #tpu.memory_space<smem>>
    %39 = vector.broadcast %38 : f32 to vector<4x16x16xf32>
    %40 = arith.mulf %37, %39 : vector<4x16x16xf32>
    %41 = arith.addf %36, %40 : vector<4x16x16xf32>
    %c0_48 = arith.constant 0 : index
    %c2_49 = arith.constant 2 : index
    %c0_50 = arith.constant 0 : index
    %42 = vector.load %arg5[%c0_48, %c2_49, %c0_50] : memref<4x18x18xf32, #tpu.memory_space<vmem>>, vector<4x16x16xf32>
    %c2_51 = arith.constant 2 : index
    %c0_52 = arith.constant 0 : index
    %43 = memref.load %arg1[%c2_51, %c0_52] : memref<3x3xf32, #tpu.memory_space<smem>>
    %44 = vector.broadcast %43 : f32 to vector<4x16x16xf32>
    %45 = arith.mulf %42, %44 : vector<4x16x16xf32>
    %46 = arith.addf %41, %45 : vector<4x16x16xf32>
    %c0_53 = arith.constant 0 : index
    %c2_54 = arith.constant 2 : index
    %c1_55 = arith.constant 1 : index
    %47 = vector.load %arg5[%c0_53, %c2_54, %c1_55] : memref<4x18x18xf32, #tpu.memory_space<vmem>>, vector<4x16x16xf32>
    %c2_56 = arith.constant 2 : index
    %c1_57 = arith.constant 1 : index
    %48 = memref.load %arg1[%c2_56, %c1_57] : memref<3x3xf32, #tpu.memory_space<smem>>
    %49 = vector.broadcast %48 : f32 to vector<4x16x16xf32>
    %50 = arith.mulf %47, %49 : vector<4x16x16xf32>
    %51 = arith.addf %46, %50 : vector<4x16x16xf32>
    %c0_58 = arith.constant 0 : index
    %c2_59 = arith.constant 2 : index
    %c2_60 = arith.constant 2 : index
    %52 = vector.load %arg5[%c0_58, %c2_59, %c2_60] : memref<4x18x18xf32, #tpu.memory_space<vmem>>, vector<4x16x16xf32>
    %c2_61 = arith.constant 2 : index
    %c2_62 = arith.constant 2 : index
    %53 = memref.load %arg1[%c2_61, %c2_62] : memref<3x3xf32, #tpu.memory_space<smem>>
    %54 = vector.broadcast %53 : f32 to vector<4x16x16xf32>
    %55 = arith.mulf %52, %54 : vector<4x16x16xf32>
    %56 = arith.addf %51, %55 : vector<4x16x16xf32>
    %c0_63 = arith.constant 0 : index
    %c0_64 = arith.constant 0 : index
    %c0_65 = arith.constant 0 : index
    %57 = vector.load %arg4[%c0_63, %c0_64, %c0_65] : memref<4x16x16xf32, #tpu.memory_space<vmem>>, vector<4x16x16xf32>
    tpu.vector_store %arg4[%c0_63, %c0_64, %c0_65], %56 {strides = array<i32>} : memref<4x16x16xf32, #tpu.memory_space<vmem>>, vector<4x16x16xf32>,
    return
  }
  func.func @transform_0(%arg0: i32) -> (i32, i32) {
    %c0_i32 = arith.constant 0 : i32
    %c0_i32_0 = arith.constant 0 : i32
    %c0_i32_1 = arith.constant 0 : i32
    return %c0_i32, %c0_i32_0 : i32, i32
  }
  func.func @transform_1(%arg0: i32) -> i32 {
    %c0_i32 = arith.constant 0 : i32
    %c0_i32_0 = arith.constant 0 : i32
    return %c0_i32 : i32
  }
  func.func @transform_2(%arg0: i32) -> (i32, i32, i32) {
    %c0_i32 = arith.constant 0 : i32
    %c0_i32_0 = arith.constant 0 : i32
    %c0_i32_1 = arith.constant 0 : i32
    return %arg0, %c0_i32, %c0_i32_0 : i32, i32, i32
  }
  func.func @transform_3(%arg0: i32) -> (i32, i32, i32) {
    %c0_i32 = arith.constant 0 : i32
    %c0_i32_0 = arith.constant 0 : i32
    %c0_i32_1 = arith.constant 0 : i32
    return %arg0, %c0_i32, %c0_i32_0 : i32, i32, i32
  }
}

</mosaic_0001>

<llo_original>
// kernel: tpu_custom_call.1
$region0: #{tpu_custom_call.1}
  #allocation0 [shape = 'u32[]', space=smem, size = 0x4, offset = 0x4, fixed_abs, tag = 'smem constant byte address 0x4 - core index']
  #allocation1 [shape = 'u32[144,128]{1,0:T(1,128)}', space=vmem, size = 0x12000, scoped, tag = 'internal scratch']
  #allocation2 [shape = 'f32[4,18,18]{2,1,0:T(8,128)}', space=vmem, size = 0xc000, scoped, tag = 'scratch operand']
  #allocation3 [shape = 'f32[1]{0:T(128)S(6)}', space=smem, size = 0x200, scoped, tag = 'scoped memory for tpu_custom_call.1']
  %s0 = inlined_call_operand.hbm [shape: f32[3,3], index: 0, kind: input, shape index: {}]
  %s1 = inlined_call_operand.<no memory space> [shape: f32[1], index: 1, kind: input, shape index: {}]
  %s2 = inlined_call_operand.hbm [shape: f32[8,16,16], index: 2, kind: input, shape index: {}]
  %s3 = inlined_call_operand.hbm [shape: f32[8,16,16], index: 3, kind: output, shape index: {}]
  %s4 = sld [smem:[#allocation0]]
  $region53: #{tpu_custom_call.1} parent=0
    _
  %s6 = ssub.s32 1, %s4
  %s7 = scalar_select 0, %s6, %s4
  %8 = sst [smem:[#allocation3]] %s1
  $region1: #{tpu_custom_call.1} parent=0
    #allocation4 [shape = 'u8[2048]{0}', space=smem, size = 0x800, scoped, tag = 'input window, operand 0, single buffered']
    #allocation5 [shape = 's32[2]{0}', space=sflag, size = 0x8, scoped, tag = 'scoped memory for tpu_custom_call.1']
    #allocation6 [shape = 's32[2]{0}', space=sflag, size = 0x8, scoped, tag = 'scoped memory for tpu_custom_call.1']
    #allocation7 [shape = 's32[2]{0}', space=sflag, size = 0x8, scoped, tag = 'scoped memory for tpu_custom_call.1']
    #allocation8 [shape = 'u8[65536]{0}', space=vmem, size = 0x10000, scoped, tag = 'input window, operand 2']
    #allocation9 [shape = 'u8[65536]{0}', space=vmem, size = 0x10000, scoped, tag = 'output window, operand 0']
    %9 = vsyncpa [#allocation7], 0
    %10 = vsyncpa [#allocation5], 0
    %s11 = scalar_lea.sflag [#allocation5], 1
    %12 = vsyncpa %s11, 0
    %13 = vsyncpa [#allocation6], 0
    %s14 = scalar_lea.sflag [#allocation6], 1
    %15 = vsyncpa %s14, 0
    loop: start=0, step=1, limit=4
    $region2: #{tpu_custom_call.1} parent=1 // loop_pre_header
      _
    $region3: #{tpu_custom_call.1} parent=1 // loop_header
      %s17 = sphi 0, %s21
      %p18 = scmp.ge.s32.totalorder %s17, 4
      %s25 = sphi 0, %s25
      %s27 = sphi 0, %s25
      %s28 = sphi 0, %s27
      %s42 = sphi 0, %s28
      %s46 = sphi 0, %s46
      %s48 = sphi 0, %s46
      %s49 = sphi 0, %s48
      %s63 = sphi 0, %s49
      %s69 = sphi 0, %s71
      %s72 = sphi 0, %s69
      %s73 = sphi 0, %s72
      %s89 = sphi 0, %s73
      %s95 = sphi 0, %s97
      %s98 = sphi 0, %s95
      %s99 = sphi 0, %s98
      %s115 = sphi 0, %s99
    $region4: #{tpu_custom_call.1} parent=1 // loop_header_branch
      %20 = sbr.rel (%p18) target = $region8
    $region5: #{tpu_custom_call.1} parent=1 // loop_body
      %s22 = ssub.s32 %s17, 1
      %s23 = ssub.s32 %s17, 2
      %s24 = sadd.s32 %s17, 1
      %s26 = sadd.s32 %s25, 1
      %p29 = scmp.eq.s32.totalorder %s17, 1
      %p30 = scmp.ne.s32.totalorder %s25, %s27
      %p31 = scmp.eq.s32.totalorder %s17, 0
      %p32 = por %p30, %p31
      %p33 = scmp.ne.s32.totalorder %s25, %s27
      %p34 = scmp.eq.s32.totalorder %s22, 1
      %p35 = por %p33, %p34
      %p36 = scmp.ne.s32.totalorder %s27, %s28
      %p37 = scmp.eq.s32.totalorder %s22, 0
      %p38 = por %p36, %p37
      %p39 = scmp.ne.s32.totalorder %s27, %s28
      %p40 = scmp.eq.s32.totalorder %s23, 1
      %p41 = por %p39, %p40
      %p43 = scmp.ne.s32.totalorder %s28, %s42
      %p44 = scmp.eq.s32.totalorder %s23, 0
      %p45 = por %p43, %p44
      %s47 = sadd.s32 %s46, 1
      %p50 = scmp.eq.s32.totalorder %s17, 1
      %p51 = scmp.ne.s32.totalorder %s46, %s48
      %p52 = scmp.eq.s32.totalorder %s17, 0
      %p53 = por %p51, %p52
      %p54 = scmp.ne.s32.totalorder %s46, %s48
      %p55 = scmp.eq.s32.totalorder %s22, 1
      %p56 = por %p54, %p55
      %p57 = scmp.ne.s32.totalorder %s48, %s49
      %p58 = scmp.eq.s32.totalorder %s22, 0
      %p59 = por %p57, %p58
      %p60 = scmp.ne.s32.totalorder %s48, %s49
      %p61 = scmp.eq.s32.totalorder %s23, 1
      %p62 = por %p60, %p61
      %p64 = scmp.ne.s32.totalorder %s49, %s63
      %p65 = scmp.eq.s32.totalorder %s23, 0
      %p66 = por %p64, %p65
      %s67 = ssub.s32 %s17, %s24
      %p68 = scmp.eq.s32.totalorder %s67, 0
      %s70 = sadd.s32 %s69, 1
      %s71 = scalar_select %p68, %s69, %s70
      %p74 = pneg %p68
      %p75 = scmp.eq.s32.totalorder %s17, 1
      %p76 = por %p74, %p75
      %p77 = scmp.ne.s32.totalorder %s69, %s72
      %p78 = scmp.eq.s32.totalorder %s17, 0
      %p79 = por %p77, %p78
      %p80 = scmp.ne.s32.totalorder %s69, %s72
      %p81 = scmp.eq.s32.totalorder %s22, 1
      %p82 = por %p80, %p81
      %p83 = scmp.ne.s32.totalorder %s72, %s73
      %p84 = scmp.eq.s32.totalorder %s22, 0
      %p85 = por %p83, %p84
      %p86 = scmp.ne.s32.totalorder %s72, %s73
      %p87 = scmp.eq.s32.totalorder %s23, 1
      %p88 = por %p86, %p87
      %p90 = scmp.ne.s32.totalorder %s73, %s89
      %p91 = scmp.eq.s32.totalorder %s23, 0
      %p92 = por %p90, %p91
      %s93 = ssub.s32 %s17, %s24
      %p94 = scmp.eq.s32.totalorder %s93, 0
      %s96 = sadd.s32 %s95, 1
      %s97 = scalar_select %p94, %s95, %s96
      %p100 = pneg %p94
      %p101 = scmp.eq.s32.totalorder %s17, 1
      %p102 = por %p100, %p101
      %p103 = scmp.ne.s32.totalorder %s95, %s98
      %p104 = scmp.eq.s32.totalorder %s17, 0
      %p105 = por %p103, %p104
      %p106 = scmp.ne.s32.totalorder %s95, %s98
      %p107 = scmp.eq.s32.totalorder %s22, 1
      %p108 = por %p106, %p107
      %p109 = scmp.ne.s32.totalorder %s98, %s99
      %p110 = scmp.eq.s32.totalorder %s22, 0
      %p111 = por %p109, %p110
      %p112 = scmp.ne.s32.totalorder %s98, %s99
      %p113 = scmp.eq.s32.totalorder %s23, 1
      %p114 = por %p112, %p113
      %p116 = scmp.ne.s32.totalorder %s99, %s115
      %p117 = scmp.eq.s32.totalorder %s23, 0
      %p118 = por %p116, %p117
      %p119 = scmp.le.s32.totalorder 1, %s17
      %p120 = scmp.lt.s32.totalorder %s17, 3
      %p121 = pnand %p119, %p120
      %p122 = pneg %p121
      // Predicated region
      $region9: #{tpu_custom_call.1} parent=5 // pred_check
        _
      $region10: #{tpu_custom_call.1} parent=5 // pred_check_branch
        %124 = sbr.rel (%p121) target = $region12
      $region11: #{tpu_custom_call.1} parent=5 // pred_region
        %s125 = ssub.s32 %s17, 1
        // Predicated region
        $region13: #{tpu_custom_call.1} parent=11 // pred_check
          %p126 = pneg %p38
        $region14: #{tpu_custom_call.1} parent=11 // pred_check_branch
          %128 = sbr.rel (%p126) target = $region16
        $region15: #{tpu_custom_call.1} parent=11 // pred_region
          %s130 = ssub.s32 64, 64
          %131 = vsyncadd [#allocation7], %s130
          %134 = dma.hbm_to_smem %s0, 64, [#allocation4], [#allocation7]
        $region16: #{tpu_custom_call.1} parent=11 // pred_fallthru
          _
        // Predicated region
        $region17: #{tpu_custom_call.1} parent=11 // pred_check
          %p135 = pneg %p59
        $region18: #{tpu_custom_call.1} parent=11 // pred_check_branch
          %137 = sbr.rel (%p135) target = $region20
        $region19: #{tpu_custom_call.1} parent=11 // pred_region
          _
        $region20: #{tpu_custom_call.1} parent=11 // pred_fallthru
          _
      $region12: #{tpu_custom_call.1} parent=5 // pred_fallthru
        _
      %p138 = scmp.lt.s32.totalorder %s17, 2
      // Predicated region
      $region21: #{tpu_custom_call.1} parent=5 // pred_check
        %p139 = pneg %p138
      $region22: #{tpu_custom_call.1} parent=5 // pred_check_branch
        %141 = sbr.rel (%p139) target = $region24
      $region23: #{tpu_custom_call.1} parent=5 // pred_region
        // Predicated region
        $region25: #{tpu_custom_call.1} parent=23 // pred_check
          %p142 = pneg %p79
        $region26: #{tpu_custom_call.1} parent=23 // pred_check_branch
          %144 = sbr.rel (%p142) target = $region28
        $region27: #{tpu_custom_call.1} parent=23 // pred_region
          %s145 = sand.u32 %s69, 1
          %s146 = scalar_lea.sflag [#allocation5], %s145
          %s147 = sand.u32 %s69, 1
          %s148 = smul.addr %s147, 64
          %s149 = scalar_lea.vmem [#allocation8], %s148
          %s150 = smul.u32 4, %s17
          %s152 = ssub.s32 1024, 1024
          %153 = vsyncadd %s146, %s152
          %s154 = smul.addr %s150, 2
          %s155 = smul.addr %s154, 128
          %s156 = scalar_lea.hbm %s2, %s155
          %s157 = sshll.u32 %s149, 4
          %s158 = int_to_ptr.vmem [resolvable:$true] %s157
          %163 = dma.hbm_to_vmem [thread:$0]  %s156, 1024, %s158, %s146, 128, 128, 8
        $region28: #{tpu_custom_call.1} parent=23 // pred_fallthru
          _
      $region24: #{tpu_custom_call.1} parent=5 // pred_fallthru
        _
      %p164 = scmp.le.s32.totalorder 1, %s17
      %p165 = scmp.lt.s32.totalorder %s17, 3
      %p166 = pnand %p164, %p165
      %p167 = pneg %p166
      // Predicated region
      $region29: #{tpu_custom_call.1} parent=5 // pred_check
        _
      $region30: #{tpu_custom_call.1} parent=5 // pred_check_branch
        %169 = sbr.rel (%p166) target = $region32
      $region31: #{tpu_custom_call.1} parent=5 // pred_region
        %s170 = ssub.s32 %s17, 1
        // Predicated region
        $region33: #{tpu_custom_call.1} parent=31 // pred_check
          %p171 = pneg %p38
        $region34: #{tpu_custom_call.1} parent=31 // pred_check_branch
          %173 = sbr.rel (%p171) target = $region36
        $region35: #{tpu_custom_call.1} parent=31 // pred_region
          %174 = dma.done [#allocation7], 64
        $region36: #{tpu_custom_call.1} parent=31 // pred_fallthru
          _
        %s175 = sand.u32 %s72, 1
        %s176 = scalar_lea.sflag [#allocation5], %s175
        %s177 = sand.u32 %s72, 1
        %s178 = smul.addr %s177, 64
        %s179 = scalar_lea.vmem [#allocation8], %s178
        // Predicated region
        $region37: #{tpu_custom_call.1} parent=31 // pred_check
          %p180 = pneg %p85
        $region38: #{tpu_custom_call.1} parent=31 // pred_check_branch
          %182 = sbr.rel (%p180) target = $region40
        $region39: #{tpu_custom_call.1} parent=31 // pred_region
          %183 = dma.done %s176, 1024
        $region40: #{tpu_custom_call.1} parent=31 // pred_fallthru
          _
        %184 = sfence
        %p185 = pneg %p38
        %p186 = pneg %p35
        %p187 = pneg %p59
        %p188 = pneg %p56
        %s189 = sand.u32 %s72, 1
        %s190 = scalar_lea.sflag [#allocation5], %s189
        %s191 = sand.u32 %s72, 1
        %s192 = smul.addr %s191, 64
        %s193 = scalar_lea.vmem [#allocation8], %s192
        %p194 = pneg %p85
        %p195 = pneg %p82
        %p196 = pneg %p111
        %p197 = pneg %p108
        %s198 = sand.u32 %s98, 1
        %s199 = scalar_lea.sflag [#allocation6], %s198
        %s200 = sand.u32 %s98, 1
        %s201 = smul.addr %s200, 64
        %s202 = scalar_lea.vmem [#allocation9], %s201
        %s203 = smul.u32 4, %s22
        %s204 = smul.u32 4, %s22
        %vm205 = vcmask 139264
        %206 = vst.msk [vmem:[#allocation2] sm:$0x1] %vm205, 0.0
        %207 = vst.msk [vmem:[#allocation2 + $0x18] sm:$0x1] %vm205, 0.0
        %208 = vst.msk [vmem:[#allocation2 + $0x30] sm:$0x1] %vm205, 0.0
        %209 = vst.msk [vmem:[#allocation2 + $0x48] sm:$0x1] %vm205, 0.0
        %210 = vst.msk [vmem:[#allocation2 + $0x11] sm:$0x1] %vm205, 0.0
        %211 = vst.msk [vmem:[#allocation2 + $0x29] sm:$0x1] %vm205, 0.0
        %212 = vst.msk [vmem:[#allocation2 + $0x41] sm:$0x1] %vm205, 0.0
        %213 = vst.msk [vmem:[#allocation2 + $0x59] sm:$0x1] %vm205, 0.0
        %vm214 = vcmask 7168
        %215 = vst.msk [vmem:[#allocation2] sm:$0xff] %vm214, 0.0
        %216 = vst.msk [vmem:[#allocation2 + $0x8] sm:$0xff] %vm214, 0.0
        %vm217 = vcmask 1024
        %218 = vst.msk [vmem:[#allocation2 + $0x10] sm:$0x3] %vm217, 0.0
        %219 = vst.msk [vmem:[#allocation2 + $0x18] sm:$0xff] %vm214, 0.0
        %220 = vst.msk [vmem:[#allocation2 + $0x20] sm:$0xff] %vm214, 0.0
        %221 = vst.msk [vmem:[#allocation2 + $0x28] sm:$0x3] %vm217, 0.0
        %222 = vst.msk [vmem:[#allocation2 + $0x30] sm:$0xff] %vm214, 0.0
        %223 = vst.msk [vmem:[#allocation2 + $0x38] sm:$0xff] %vm214, 0.0
        %224 = vst.msk [vmem:[#allocation2 + $0x40] sm:$0x3] %vm217, 0.0
        %225 = vst.msk [vmem:[#allocation2 + $0x48] sm:$0xff] %vm214, 0.0
        %226 = vst.msk [vmem:[#allocation2 + $0x50] sm:$0xff] %vm214, 0.0
        %227 = vst.msk [vmem:[#allocation2 + $0x58] sm:$0x3] %vm217, 0.0
        %vm228 = vcmask 146568
        %229 = vst.msk [vmem:[#allocation2] sm:$0xff] %vm228, 0.0
        %230 = vst.msk [vmem:[#allocation2 + $0x8] sm:$0xff] %vm228, 0.0
        %vm231 = vcmask 140424
        %232 = vst.msk [vmem:[#allocation2 + $0x10] sm:$0x3] %vm231, 0.0
        %233 = vst.msk [vmem:[#allocation2 + $0x18] sm:$0xff] %vm228, 0.0
        %234 = vst.msk [vmem:[#allocation2 + $0x20] sm:$0xff] %vm228, 0.0
        %235 = vst.msk [vmem:[#allocation2 + $0x28] sm:$0x3] %vm231, 0.0
        %236 = vst.msk [vmem:[#allocation2 + $0x30] sm:$0xff] %vm228, 0.0
        %237 = vst.msk [vmem:[#allocation2 + $0x38] sm:$0xff] %vm228, 0.0
        %238 = vst.msk [vmem:[#allocation2 + $0x40] sm:$0x3] %vm231, 0.0
        %239 = vst.msk [vmem:[#allocation2 + $0x48] sm:$0xff] %vm228, 0.0
        %240 = vst.msk [vmem:[#allocation2 + $0x50] sm:$0xff] %vm228, 0.0
        %241 = vst.msk [vmem:[#allocation2 + $0x58] sm:$0x3] %vm231, 0.0
        %v242 = vld [vmem:[%s179] sm:$0xff]
        %v243 = vld [vmem:[%s179 + $0x8] sm:$0xff]
        %v244 = vld [vmem:[%s179 + $0x10] sm:$0xff]
        %v245 = vld [vmem:[%s179 + $0x18] sm:$0xff]
        %v246 = vld [vmem:[%s179 + $0x20] sm:$0xff]
        %v247 = vld [vmem:[%s179 + $0x28] sm:$0xff]
        %v248 = vld [vmem:[%s179 + $0x30] sm:$0xff]
        %v249 = vld [vmem:[%s179 + $0x38] sm:$0xff]
        %258 = vrot.lane.b32.xlu0 %v242, 1
        %v259 = vpop.permute.xlu0 %258
        %260 = vrot.lane.b32.xlu0 %v243, 1
        %v261 = vpop.permute.xlu0 %260
        %262 = vrot.lane.b32.xlu0 %v244, 1
        %v263 = vpop.permute.xlu0 %262
        %264 = vrot.lane.b32.xlu0 %v245, 1
        %v265 = vpop.permute.xlu0 %264
        %266 = vrot.lane.b32.xlu0 %v246, 1
        %v267 = vpop.permute.xlu0 %266
        %268 = vrot.lane.b32.xlu0 %v247, 1
        %v269 = vpop.permute.xlu0 %268
        %270 = vrot.lane.b32.xlu0 %v248, 1
        %v271 = vpop.permute.xlu0 %270
        %272 = vrot.lane.b32.xlu0 %v249, 1
        %v273 = vpop.permute.xlu0 %272
        %vm282 = vcmask 138248
        %283 = vst.msk [vmem:[#allocation2 + $0x1] sm:$0xff] %vm282, %v259
        %284 = vst.msk [vmem:[#allocation2 + $0x9] sm:$0xff] %vm282, %v261
        %285 = vst.msk [vmem:[#allocation2 + $0x19] sm:$0xff] %vm282, %v263
        %286 = vst.msk [vmem:[#allocation2 + $0x21] sm:$0xff] %vm282, %v265
        %287 = vst.msk [vmem:[#allocation2 + $0x31] sm:$0xff] %vm282, %v267
        %288 = vst.msk [vmem:[#allocation2 + $0x39] sm:$0xff] %vm282, %v269
        %289 = vst.msk [vmem:[#allocation2 + $0x49] sm:$0xff] %vm282, %v271
        %290 = vst.msk [vmem:[#allocation2 + $0x51] sm:$0xff] %vm282, %v273
        %s291 = sld [smem:[#allocation3]]
        %v292 = vstv %s291
        %v293 = vld [vmem:[#allocation2] sm:$0xff]
        %v294 = vld [vmem:[#allocation2 + $0x8] sm:$0xff]
        %v295 = vld [vmem:[#allocation2 + $0x18] sm:$0xff]
        %v296 = vld [vmem:[#allocation2 + $0x20] sm:$0xff]
        %v297 = vld [vmem:[#allocation2 + $0x30] sm:$0xff]
        %v298 = vld [vmem:[#allocation2 + $0x38] sm:$0xff]
        %v299 = vld [vmem:[#allocation2 + $0x48] sm:$0xff]
        %v300 = vld [vmem:[#allocation2 + $0x50] sm:$0xff]
        %s301 = sld [smem:[#allocation4]]
        %v302 = vstv %s301
        %v303 = vmul.f32 %v293, %v302
        %v304 = vmul.f32 %v294, %v302
        %v305 = vmul.f32 %v295, %v302
        %v306 = vmul.f32 %v296, %v302
        %v307 = vmul.f32 %v297, %v302
        %v308 = vmul.f32 %v298, %v302
        %v309 = vmul.f32 %v299, %v302
        %v310 = vmul.f32 %v300, %v302
        %v311 = vadd.f32 %v292, %v303
        %v312 = vadd.f32 %v292, %v304
        %v313 = vadd.f32 %v292, %v305
        %v314 = vadd.f32 %v292, %v306
        %v315 = vadd.f32 %v292, %v307
        %v316 = vadd.f32 %v292, %v308
        %v317 = vadd.f32 %v292, %v309
        %v318 = vadd.f32 %v292, %v310
        %s319 = sld [smem:[#allocation4 + $0x1]]
        %v320 = vstv %s319
        %v321 = vmul.f32 %v293, %v320
        %v322 = vmul.f32 %v294, %v320
        %v323 = vmul.f32 %v295, %v320
        %v324 = vmul.f32 %v296, %v320
        %v325 = vmul.f32 %v297, %v320
        %v326 = vmul.f32 %v298, %v320
        %v327 = vmul.f32 %v299, %v320
        %v328 = vmul.f32 %v300, %v320
        %337 = vrot.lane.b32.xlu0 %v321, 127
        %v338 = vpop.permute.xlu0 %337
        %339 = vrot.lane.b32.xlu0 %v322, 127
        %v340 = vpop.permute.xlu0 %339
        %341 = vrot.lane.b32.xlu0 %v323, 127
        %v342 = vpop.permute.xlu0 %341
        %343 = vrot.lane.b32.xlu0 %v324, 127
        %v344 = vpop.permute.xlu0 %343
        %345 = vrot.lane.b32.xlu0 %v325, 127
        %v346 = vpop.permute.xlu0 %345
        %347 = vrot.lane.b32.xlu0 %v326, 127
        %v348 = vpop.permute.xlu0 %347
        %349 = vrot.lane.b32.xlu0 %v327, 127
        %v350 = vpop.permute.xlu0 %349
        %351 = vrot.lane.b32.xlu0 %v328, 127
        %v352 = vpop.permute.xlu0 %351
        %v361 = vadd.f32 %v311, %v338
        %v362 = vadd.f32 %v312, %v340
        %v363 = vadd.f32 %v313, %v342
        %v364 = vadd.f32 %v314, %v344
        %v365 = vadd.f32 %v315, %v346
        %v366 = vadd.f32 %v316, %v348
        %v367 = vadd.f32 %v317, %v350
        %v368 = vadd.f32 %v318, %v352
        %s369 = sld [smem:[#allocation4 + $0x2]]
        %v370 = vstv %s369
        %v371 = vmul.f32 %v293, %v370
        %v372 = vmul.f32 %v294, %v370
        %v373 = vmul.f32 %v295, %v370
        %v374 = vmul.f32 %v296, %v370
        %v375 = vmul.f32 %v297, %v370
        %v376 = vmul.f32 %v298, %v370
        %v377 = vmul.f32 %v299, %v370
        %v378 = vmul.f32 %v300, %v370
        %387 = vrot.lane.b32.xlu0 %v371, 126
        %v388 = vpop.permute.xlu0 %387
        %389 = vrot.lane.b32.xlu0 %v372, 126
        %v390 = vpop.permute.xlu0 %389
        %391 = vrot.lane.b32.xlu0 %v373, 126
        %v392 = vpop.permute.xlu0 %391
        %393 = vrot.lane.b32.xlu0 %v374, 126
        %v394 = vpop.permute.xlu0 %393
        %395 = vrot.lane.b32.xlu0 %v375, 126
        %v396 = vpop.permute.xlu0 %395
        %397 = vrot.lane.b32.xlu0 %v376, 126
        %v398 = vpop.permute.xlu0 %397
        %399 = vrot.lane.b32.xlu0 %v377, 126
        %v400 = vpop.permute.xlu0 %399
        %401 = vrot.lane.b32.xlu0 %v378, 126
        %v402 = vpop.permute.xlu0 %401
        %v411 = vadd.f32 %v361, %v388
        %v412 = vadd.f32 %v362, %v390
        %v413 = vadd.f32 %v363, %v392
        %v414 = vadd.f32 %v364, %v394
        %v415 = vadd.f32 %v365, %v396
        %v416 = vadd.f32 %v366, %v398
        %v417 = vadd.f32 %v367, %v400
        %v418 = vadd.f32 %v368, %v402
        %v419 = vld [vmem:[#allocation2 + $0x1] sm:$0xff]
        %v420 = vld [vmem:[#allocation2 + $0x9] sm:$0xff]
        %v421 = vld [vmem:[#allocation2 + $0x19] sm:$0xff]
        %v422 = vld [vmem:[#allocation2 + $0x21] sm:$0xff]
        %v423 = vld [vmem:[#allocation2 + $0x31] sm:$0xff]
        %v424 = vld [vmem:[#allocation2 + $0x39] sm:$0xff]
        %v425 = vld [vmem:[#allocation2 + $0x49] sm:$0xff]
        %v426 = vld [vmem:[#allocation2 + $0x51] sm:$0xff]
        %s427 = sld [smem:[#allocation4 + $0x80]]
        %v428 = vstv %s427
        %v429 = vmul.f32 %v419, %v428
        %v430 = vmul.f32 %v420, %v428
        %v431 = vmul.f32 %v421, %v428
        %v432 = vmul.f32 %v422, %v428
        %v433 = vmul.f32 %v423, %v428
        %v434 = vmul.f32 %v424, %v428
        %v435 = vmul.f32 %v425, %v428
        %v436 = vmul.f32 %v426, %v428
        %v437 = vadd.f32 %v411, %v429
        %v438 = vadd.f32 %v412, %v430
        %v439 = vadd.f32 %v413, %v431
        %v440 = vadd.f32 %v414, %v432
        %v441 = vadd.f32 %v415, %v433
        %v442 = vadd.f32 %v416, %v434
        %v443 = vadd.f32 %v417, %v435
        %v444 = vadd.f32 %v418, %v436
        %s445 = sld [smem:[#allocation4 + $0x81]]
        %v446 = vstv %s445
        %v447 = vmul.f32 %v419, %v446
        %v448 = vmul.f32 %v420, %v446
        %v449 = vmul.f32 %v421, %v446
        %v450 = vmul.f32 %v422, %v446
        %v451 = vmul.f32 %v423, %v446
        %v452 = vmul.f32 %v424, %v446
        %v453 = vmul.f32 %v425, %v446
        %v454 = vmul.f32 %v426, %v446
        %463 = vrot.lane.b32.xlu0 %v447, 127
        %v464 = vpop.permute.xlu0 %463
        %465 = vrot.lane.b32.xlu0 %v448, 127
        %v466 = vpop.permute.xlu0 %465
        %467 = vrot.lane.b32.xlu0 %v449, 127
        %v468 = vpop.permute.xlu0 %467
        %469 = vrot.lane.b32.xlu0 %v450, 127
        %v470 = vpop.permute.xlu0 %469
        %471 = vrot.lane.b32.xlu0 %v451, 127
        %v472 = vpop.permute.xlu0 %471
        %473 = vrot.lane.b32.xlu0 %v452, 127
        %v474 = vpop.permute.xlu0 %473
        %475 = vrot.lane.b32.xlu0 %v453, 127
        %v476 = vpop.permute.xlu0 %475
        %477 = vrot.lane.b32.xlu0 %v454, 127
        %v478 = vpop.permute.xlu0 %477
        %v487 = vadd.f32 %v437, %v464
        %v488 = vadd.f32 %v438, %v466
        %v489 = vadd.f32 %v439, %v468
        %v490 = vadd.f32 %v440, %v470
        %v491 = vadd.f32 %v441, %v472
        %v492 = vadd.f32 %v442, %v474
        %v493 = vadd.f32 %v443, %v476
        %v494 = vadd.f32 %v444, %v478
        %s495 = sld [smem:[#allocation4 + $0x82]]
        %v496 = vstv %s495
        %v497 = vmul.f32 %v419, %v496
        %v498 = vmul.f32 %v420, %v496
        %v499 = vmul.f32 %v421, %v496
        %v500 = vmul.f32 %v422, %v496
        %v501 = vmul.f32 %v423, %v496
        %v502 = vmul.f32 %v424, %v496
        %v503 = vmul.f32 %v425, %v496
        %v504 = vmul.f32 %v426, %v496
        %513 = vrot.lane.b32.xlu0 %v497, 126
        %v514 = vpop.permute.xlu0 %513
        %515 = vrot.lane.b32.xlu0 %v498, 126
        %v516 = vpop.permute.xlu0 %515
        %517 = vrot.lane.b32.xlu0 %v499, 126
        %v518 = vpop.permute.xlu0 %517
        %519 = vrot.lane.b32.xlu0 %v500, 126
        %v520 = vpop.permute.xlu0 %519
        %521 = vrot.lane.b32.xlu0 %v501, 126
        %v522 = vpop.permute.xlu0 %521
        %523 = vrot.lane.b32.xlu0 %v502, 126
        %v524 = vpop.permute.xlu0 %523
        %525 = vrot.lane.b32.xlu0 %v503, 126
        %v526 = vpop.permute.xlu0 %525
        %527 = vrot.lane.b32.xlu0 %v504, 126
        %v528 = vpop.permute.xlu0 %527
        %v537 = vadd.f32 %v487, %v514
        %v538 = vadd.f32 %v488, %v516
        %v539 = vadd.f32 %v489, %v518
        %v540 = vadd.f32 %v490, %v520
        %v541 = vadd.f32 %v491, %v522
        %v542 = vadd.f32 %v492, %v524
        %v543 = vadd.f32 %v493, %v526
        %v544 = vadd.f32 %v494, %v528
        %v545 = vld [vmem:[#allocation2 + $0x2] sm:$0xff]
        %v546 = vld [vmem:[#allocation2 + $0xa] sm:$0xff]
        %v547 = vld [vmem:[#allocation2 + $0x1a] sm:$0xff]
        %v548 = vld [vmem:[#allocation2 + $0x22] sm:$0xff]
        %v549 = vld [vmem:[#allocation2 + $0x32] sm:$0xff]
        %v550 = vld [vmem:[#allocation2 + $0x3a] sm:$0xff]
        %v551 = vld [vmem:[#allocation2 + $0x4a] sm:$0xff]
        %v552 = vld [vmem:[#allocation2 + $0x52] sm:$0xff]
        %s553 = sld [smem:[#allocation4 + $0x100]]
        %v554 = vstv %s553
        %v555 = vmul.f32 %v545, %v554
        %v556 = vmul.f32 %v546, %v554
        %v557 = vmul.f32 %v547, %v554
        %v558 = vmul.f32 %v548, %v554
        %v559 = vmul.f32 %v549, %v554
        %v560 = vmul.f32 %v550, %v554
        %v561 = vmul.f32 %v551, %v554
        %v562 = vmul.f32 %v552, %v554
        %v563 = vadd.f32 %v537, %v555
        %v564 = vadd.f32 %v538, %v556
        %v565 = vadd.f32 %v539, %v557
        %v566 = vadd.f32 %v540, %v558
        %v567 = vadd.f32 %v541, %v559
        %v568 = vadd.f32 %v542, %v560
        %v569 = vadd.f32 %v543, %v561
        %v570 = vadd.f32 %v544, %v562
        %s571 = sld [smem:[#allocation4 + $0x101]]
        %v572 = vstv %s571
        %v573 = vmul.f32 %v545, %v572
        %v574 = vmul.f32 %v546, %v572
        %v575 = vmul.f32 %v547, %v572
        %v576 = vmul.f32 %v548, %v572
        %v577 = vmul.f32 %v549, %v572
        %v578 = vmul.f32 %v550, %v572
        %v579 = vmul.f32 %v551, %v572
        %v580 = vmul.f32 %v552, %v572
        %589 = vrot.lane.b32.xlu0 %v573, 127
        %v590 = vpop.permute.xlu0 %589
        %591 = vrot.lane.b32.xlu0 %v574, 127
        %v592 = vpop.permute.xlu0 %591
        %593 = vrot.lane.b32.xlu0 %v575, 127
        %v594 = vpop.permute.xlu0 %593
        %595 = vrot.lane.b32.xlu0 %v576, 127
        %v596 = vpop.permute.xlu0 %595
        %597 = vrot.lane.b32.xlu0 %v577, 127
        %v598 = vpop.permute.xlu0 %597
        %599 = vrot.lane.b32.xlu0 %v578, 127
        %v600 = vpop.permute.xlu0 %599
        %601 = vrot.lane.b32.xlu0 %v579, 127
        %v602 = vpop.permute.xlu0 %601
        %603 = vrot.lane.b32.xlu0 %v580, 127
        %v604 = vpop.permute.xlu0 %603
        %v613 = vadd.f32 %v563, %v590
        %v614 = vadd.f32 %v564, %v592
        %v615 = vadd.f32 %v565, %v594
        %v616 = vadd.f32 %v566, %v596
        %v617 = vadd.f32 %v567, %v598
        %v618 = vadd.f32 %v568, %v600
        %v619 = vadd.f32 %v569, %v602
        %v620 = vadd.f32 %v570, %v604
        %s621 = sld [smem:[#allocation4 + $0x102]]
        %v622 = vstv %s621
        %v623 = vmul.f32 %v545, %v622
        %v624 = vmul.f32 %v546, %v622
        %v625 = vmul.f32 %v547, %v622
        %v626 = vmul.f32 %v548, %v622
        %v627 = vmul.f32 %v549, %v622
        %v628 = vmul.f32 %v550, %v622
        %v629 = vmul.f32 %v551, %v622
        %v630 = vmul.f32 %v552, %v622
        %639 = vrot.lane.b32.xlu0 %v623, 126
        %v640 = vpop.permute.xlu0 %639
        %641 = vrot.lane.b32.xlu0 %v624, 126
        %v642 = vpop.permute.xlu0 %641
        %643 = vrot.lane.b32.xlu0 %v625, 126
        %v644 = vpop.permute.xlu0 %643
        %645 = vrot.lane.b32.xlu0 %v626, 126
        %v646 = vpop.permute.xlu0 %645
        %647 = vrot.lane.b32.xlu0 %v627, 126
        %v648 = vpop.permute.xlu0 %647
        %649 = vrot.lane.b32.xlu0 %v628, 126
        %v650 = vpop.permute.xlu0 %649
        %651 = vrot.lane.b32.xlu0 %v629, 126
        %v652 = vpop.permute.xlu0 %651
        %653 = vrot.lane.b32.xlu0 %v630, 126
        %v654 = vpop.permute.xlu0 %653
        %v663 = vadd.f32 %v613, %v640
        %v664 = vadd.f32 %v614, %v642
        %v665 = vadd.f32 %v615, %v644
        %v666 = vadd.f32 %v616, %v646
        %v667 = vadd.f32 %v617, %v648
        %v668 = vadd.f32 %v618, %v650
        %v669 = vadd.f32 %v619, %v652
        %v670 = vadd.f32 %v620, %v654
        %vm671 = vcmask 130048
        %672 = vst.msk [vmem:[%s202] sm:$0xff] %vm671, %v663
        %673 = vst.msk [vmem:[%s202 + $0x8] sm:$0xff] %vm671, %v664
        %674 = vst.msk [vmem:[%s202 + $0x10] sm:$0xff] %vm671, %v665
        %675 = vst.msk [vmem:[%s202 + $0x18] sm:$0xff] %vm671, %v666
        %676 = vst.msk [vmem:[%s202 + $0x20] sm:$0xff] %vm671, %v667
        %677 = vst.msk [vmem:[%s202 + $0x28] sm:$0xff] %vm671, %v668
        %678 = vst.msk [vmem:[%s202 + $0x30] sm:$0xff] %vm671, %v669
        %679 = vst.msk [vmem:[%s202 + $0x38] sm:$0xff] %vm671, %v670
        %s680 = sand.u32 %s98, 1
        %s681 = scalar_lea.sflag [#allocation6], %s680
        %s682 = sand.u32 %s98, 1
        %s683 = smul.addr %s682, 64
        %s684 = scalar_lea.vmem [#allocation9], %s683
        // Predicated region
        $region41: #{tpu_custom_call.1} parent=31 // pred_check
          %p685 = pneg %p108
        $region42: #{tpu_custom_call.1} parent=31 // pred_check_branch
          %687 = sbr.rel (%p685) target = $region44
        $region43: #{tpu_custom_call.1} parent=31 // pred_region
          %s688 = smul.u32 4, %s22
          %s690 = ssub.s32 1024, 1024
          %691 = vsyncadd %s681, %s690
          %s692 = smul.addr %s688, 2
          %s693 = smul.addr %s692, 128
          %s694 = scalar_lea.hbm %s3, %s693
          %s695 = sshll.u32 %s684, 4
          %s696 = int_to_ptr.vmem [resolvable:$true] %s695
          %701 = dma.vmem_to_hbm [thread:$0]  %s696, 1024, %s694, %s681, 128, 128, 8
        $region44: #{tpu_custom_call.1} parent=31 // pred_fallthru
          _
      $region32: #{tpu_custom_call.1} parent=5 // pred_fallthru
        _
      %p702 = scmp.le.s32.totalorder 2, %s17
      // Predicated region
      $region45: #{tpu_custom_call.1} parent=5 // pred_check
        %p703 = pneg %p702
      $region46: #{tpu_custom_call.1} parent=5 // pred_check_branch
        %705 = sbr.rel (%p703) target = $region48
      $region47: #{tpu_custom_call.1} parent=5 // pred_region
        %s706 = ssub.s32 %s17, 2
        // Predicated region
        $region49: #{tpu_custom_call.1} parent=47 // pred_check
          %p707 = pneg %p114
        $region50: #{tpu_custom_call.1} parent=47 // pred_check_branch
          %709 = sbr.rel (%p707) target = $region52
        $region51: #{tpu_custom_call.1} parent=47 // pred_region
          %s710 = sand.u32 %s99, 1
          %s711 = scalar_lea.sflag [#allocation6], %s710
          %s712 = sand.u32 %s99, 1
          %s713 = smul.addr %s712, 64
          %s714 = scalar_lea.vmem [#allocation9], %s713
          %715 = dma.done %s711, 1024
        $region52: #{tpu_custom_call.1} parent=47 // pred_fallthru
          _
      $region48: #{tpu_custom_call.1} parent=5 // pred_fallthru
        _
    $region6: #{tpu_custom_call.1} parent=1 // loop_footer
      %s21 = sadd.s32 1, %s17
    $region7: #{tpu_custom_call.1} parent=1 // loop_footer_branch
      %16 = sbr.rel target = $region3
    $region8: #{tpu_custom_call.1} parent=1 // loop_exit
      _
    %716 = vsyncpa [#allocation5], 1
    %s717 = scalar_lea.sflag [#allocation5], 1
    %718 = vsyncpa %s717, 1
    %719 = vsyncpa [#allocation6], 1
    %s720 = scalar_lea.sflag [#allocation6], 1
    %721 = vsyncpa %s720, 1
    %722 = vsyncpa [#allocation7], 1
    %s723 = scalar_lea.sflag [#allocation7], 1
    %724 = vsyncpa %s723, 1

</llo_original>
